<compile_context>
chip_gen: v7x
topology: tpu7x:2x2x1
jax: 0.10.0
libtpu: 0.0.40
codegen_flags: <defaults>
</compile_context>

<pallas_src>
import jax
import jax.numpy as jnp
from jax.experimental import pallas as pl
from jax.experimental.pallas import tpu as pltpu

X0_FEATURES = 3
X1_FEATURES = 1280
IN_FEATURES = X0_FEATURES + X1_FEATURES   # 1283
HIDDEN = 256
OUT_FEATURES = 3

OUT_PAD = 8        # output lanes (3 real values + 5 zero pad)
MAX_TB = 1024      # max batch-tile rows (fits comfortably in 32 MiB scoped VMEM)


def _round_up(n, m):
    return ((n + m - 1) // m) * m


def _mlp_kernel(x0_ref, x1_ref, w1a_ref, w1b_ref, b1_ref, w2_ref, b2_ref, o_ref):
    # h = relu([x0 | x1] @ W1 + b1), K-split so no feature concat is ever built:
    #   [x0 | x1] @ W1 == x1 @ W1[3:, :]  (MXU, bf16)  +  x0 @ W1[:3, :]  (3 VPU FMAs)
    x1 = x1_ref[...].astype(jnp.bfloat16)                      # in-VMEM cast (free VPU)
    h = jnp.dot(x1, w1b_ref[...], preferred_element_type=jnp.float32)   # (TB, 256) f32

    x0 = x0_ref[...]                                           # (TB, 3) f32
    w1a = w1a_ref[...]                                         # (3, 256) f32
    h = h + (x0[:, 0:1] * w1a[0:1, :]
             + x0[:, 1:2] * w1a[1:2, :]
             + x0[:, 2:3] * w1a[2:3, :])
    h = jnp.maximum(h + b1_ref[...], 0.0)

    # Second layer is tiny (256 x 8 lanes); keep it f32.
    o_ref[...] = jnp.dot(h, w2_ref[...], preferred_element_type=jnp.float32) + b2_ref[...]


def prepare_params(w1, b1, w2, b2):
    """One-time (init-side) padding / casting of the predictor parameters.

    w1: (1283, 256)  (PyTorch weight transposed to (in, out))
    b1: (256,), w2: (256, 3), b2: (3,)
    """
    w1 = jnp.asarray(w1, jnp.float32)
    w1a = w1[:X0_FEATURES, :]                                        # (3, 256)    f32 (VPU path)
    w1b = w1[X0_FEATURES:, :].astype(jnp.bfloat16)                   # (1280, 256) bf16 (MXU path)
    b1p = jnp.asarray(b1, jnp.float32).reshape(1, HIDDEN)            # (1, 256)    f32
    w2p = (jnp.zeros((HIDDEN, OUT_PAD), jnp.float32)
           .at[:, :OUT_FEATURES].set(jnp.asarray(w2, jnp.float32)))  # (256, 8)    f32
    b2p = (jnp.zeros((1, OUT_PAD), jnp.float32)
           .at[0, :OUT_FEATURES].set(jnp.asarray(b2, jnp.float32)))  # (1, 8)      f32
    return w1a, w1b, b1p, w2p, b2p


@jax.jit
def linear_sensor_forward(x0, x1, w1a, w1b, b1p, w2p, b2p):
    """Pallas implementation of LinearSensor.forward (predictor head).

    x0: (B, *) -> flattened to (B, 3)
    x1: (B, 1280) features (defie() output stand-in)
    Remaining args come from prepare_params().
    """
    B = x0.shape[0]
    x0_flat = x0.reshape(B, -1).astype(jnp.float32)
    assert x0_flat.shape[1] == X0_FEATURES, x0_flat.shape
    assert x1.shape == (B, X1_FEATURES), x1.shape

    # Only the tiny B < 8 case pads batch rows (few-KB copy); otherwise the inputs are
    # passed as-is and ragged batches use a partial edge block (garbage rows fall in
    # output rows that are sliced off below).
    if B < 8:
        Bp = 8
        x0_flat = jnp.zeros((Bp, X0_FEATURES), jnp.float32).at[:B, :].set(x0_flat)
        x1 = jnp.zeros((Bp, X1_FEATURES), x1.dtype).at[:B, :].set(x1)
    else:
        Bp = B

    if Bp <= 8:
        TB = 8
    else:
        # Big tiles for DMA efficiency, but always >= 2 grid steps when possible so
        # v7x can shard the "parallel" batch axis across both TensorCores.
        TB = min(MAX_TB, _round_up(pl.cdiv(Bp, 2), 8))
    grid = (pl.cdiv(Bp, TB),)

    flops = 2 * B * IN_FEATURES * HIDDEN + 2 * B * HIDDEN * OUT_FEATURES
    bytes_accessed = (x0_flat.size * x0_flat.dtype.itemsize
                      + x1.size * x1.dtype.itemsize
                      + w1a.size * 4 + w1b.size * 2
                      + b1p.size * 4 + w2p.size * 4 + b2p.size * 4
                      + Bp * OUT_PAD * 4)

    out_p = pl.pallas_call(
        _mlp_kernel,
        out_shape=jax.ShapeDtypeStruct((Bp, OUT_PAD), jnp.float32),
        grid=grid,
        in_specs=[
            pl.BlockSpec((TB, X0_FEATURES), lambda i: (i, 0)),
            pl.BlockSpec((TB, X1_FEATURES), lambda i: (i, 0)),
            # Weights / biases stay resident across all batch tiles:
            pl.BlockSpec((X0_FEATURES, HIDDEN), lambda i: (0, 0)),
            pl.BlockSpec((X1_FEATURES, HIDDEN), lambda i: (0, 0)),
            pl.BlockSpec((1, HIDDEN), lambda i: (0, 0)),
            pl.BlockSpec((HIDDEN, OUT_PAD), lambda i: (0, 0)),
            pl.BlockSpec((1, OUT_PAD), lambda i: (0, 0)),
        ],
        out_specs=pl.BlockSpec((TB, OUT_PAD), lambda i: (i, 0)),
        compiler_params=pltpu.CompilerParams(
            dimension_semantics=("parallel",),
            vmem_limit_bytes=32 * 1024 * 1024,   # v5e default (16 MiB) is too small at TB=1024
        ),
        cost_estimate=pl.CostEstimate(
            flops=flops, transcendentals=0, bytes_accessed=bytes_accessed),
    )(x0_flat, x1, w1a, w1b, b1p, w2p, b2p)

    return out_p[:B, :OUT_FEATURES]


def _xavier_uniform(key, fan_in, fan_out):
    # Matches nn.init.xavier_uniform_(gain=1.0): U(-a, a), a = sqrt(6/(fan_in+fan_out))
    a = (6.0 / (fan_in + fan_out)) ** 0.5
    return jax.random.uniform(key, (fan_in, fan_out), jnp.float32, -a, a)


if __name__ == "__main__":
    key = jax.random.PRNGKey(0)
    k_x0, k_x1, k_w1, k_b1, k_w2, k_b2 = jax.random.split(key, 6)

    B = 2
    x0 = jax.random.normal(k_x0, (B, 3), jnp.float32)        # flattens to 3 features
    x1 = jax.random.normal(k_x1, (B, 1280), jnp.float32)     # defie() feature stand-in

    # Predictor parameters (Linear weights stored as (in, out) = W.T of PyTorch layout).
    w1 = _xavier_uniform(k_w1, IN_FEATURES, HIDDEN)
    w2 = _xavier_uniform(k_w2, HIDDEN, OUT_FEATURES)
    # PyTorch default Linear bias init: U(-1/sqrt(fan_in), 1/sqrt(fan_in))
    b1 = jax.random.uniform(k_b1, (HIDDEN,), jnp.float32,
                            -1.0 / IN_FEATURES ** 0.5, 1.0 / IN_FEATURES ** 0.5)
    b2 = jax.random.uniform(k_b2, (OUT_FEATURES,), jnp.float32,
                            -1.0 / HIDDEN ** 0.5, 1.0 / HIDDEN ** 0.5)

    # One-time parameter preparation (padding / bf16 cast) done outside the hot path.
    params = prepare_params(w1, b1, w2, b2)

    out = linear_sensor_forward(x0, x1, *params)
    out = jax.block_until_ready(out)
    assert out.shape == (B, OUT_FEATURES), out.shape

    # Cross-check against a plain-JAX f32 reference (bf16 W1/x1 path -> loose tolerance).
    x_ref = jnp.concatenate([x0.reshape(B, -1), x1], axis=1)
    ref = jnp.maximum(x_ref @ w1 + b1, 0.0) @ w2 + b2
    assert jnp.allclose(out, ref, atol=1e-1, rtol=1e-1), (out, ref)

    print("KERNEL_OK")
</pallas_src>

<mosaic_0001>
module attributes {stable_mosaic.version = 11 : i64} {
  func.func @_mlp_kernel(%arg0: i32, %arg1: memref<8x3xf32, #tpu.memory_space<vmem>>, %arg2: memref<8x1280xf32, #tpu.memory_space<vmem>>, %arg3: memref<3x256xf32, #tpu.memory_space<vmem>>, %arg4: memref<1280x256xbf16, #tpu.memory_space<vmem>>, %arg5: memref<1x256xf32, #tpu.memory_space<vmem>>, %arg6: memref<256x8xf32, #tpu.memory_space<vmem>>, %arg7: memref<1x8xf32, #tpu.memory_space<vmem>>, %arg8: memref<8x8xf32, #tpu.memory_space<vmem>>) attributes {dimension_semantics = [#tpu.dimension_semantics<parallel>], iteration_bounds = array<i64: 1>, scalar_prefetch = 0 : i64, scratch_operands = 0 : i64, tpu.core_type = #tpu.core_type<tc>, window_params = [{transform_indices = @transform_0, window_bounds = array<i64: 8, 3>}, {transform_indices = @transform_1, window_bounds = array<i64: 8, 1280>}, {pipeline_mode = #tpu.pipeline_mode<synchronous>, transform_indices = @transform_2, window_bounds = array<i64: 3, 256>}, {pipeline_mode = #tpu.pipeline_mode<synchronous>, transform_indices = @transform_3, window_bounds = array<i64: 1280, 256>}, {pipeline_mode = #tpu.pipeline_mode<synchronous>, transform_indices = @transform_4, window_bounds = array<i64: 1, 256>}, {pipeline_mode = #tpu.pipeline_mode<synchronous>, transform_indices = @transform_5, window_bounds = array<i64: 256, 8>}, {pipeline_mode = #tpu.pipeline_mode<synchronous>, transform_indices = @transform_6, window_bounds = array<i64: 1, 8>}, {transform_indices = @transform_7, window_bounds = array<i64: 8, 8>}]} {
    %c0 = arith.constant 0 : index
    %c0_0 = arith.constant 0 : index
    %0 = vector.load %arg2[%c0, %c0_0] : memref<8x1280xf32, #tpu.memory_space<vmem>>, vector<8x1280xf32>
    %1 = arith.truncf %0 : vector<8x1280xf32> to vector<8x1280xbf16>
    %c0_1 = arith.constant 0 : index
    %c0_2 = arith.constant 0 : index
    %2 = vector.load %arg4[%c0_1, %c0_2] : memref<1280x256xbf16, #tpu.memory_space<vmem>>, vector<1280x256xbf16>
    %cst = arith.constant dense<0.000000e+00> : vector<8x256xf32>
    %3 = tpu.matmul %1, %2, %cst {dimension_numbers = #tpu.dot_dimension_numbers<[1], [0], [0], [1], [0, 0, 1, 1], [], []>} : vector<8x1280xbf16>, vector<1280x256xbf16>, vector<8x256xf32> -> vector<8x256xf32>
    %c0_3 = arith.constant 0 : index
    %c0_4 = arith.constant 0 : index
    %4 = vector.load %arg1[%c0_3, %c0_4] : memref<8x3xf32, #tpu.memory_space<vmem>>, vector<8x3xf32>
    %c0_5 = arith.constant 0 : index
    %c0_6 = arith.constant 0 : index
    %5 = vector.load %arg3[%c0_5, %c0_6] : memref<3x256xf32, #tpu.memory_space<vmem>>, vector<3x256xf32>
    %6 = vector.extract_strided_slice %4 {offsets = [0, 0], sizes = [8, 1], strides = [1, 1]} : vector<8x3xf32> to vector<8x1xf32>
    %7 = vector.extract_strided_slice %5 {offsets = [0, 0], sizes = [1, 256], strides = [1, 1]} : vector<3x256xf32> to vector<1x256xf32>
    %8 = vector.broadcast %6 : vector<8x1xf32> to vector<8x256xf32>
    %9 = vector.broadcast %7 : vector<1x256xf32> to vector<8x256xf32>
    %10 = arith.mulf %8, %9 : vector<8x256xf32>
    %11 = vector.extract_strided_slice %4 {offsets = [0, 1], sizes = [8, 1], strides = [1, 1]} : vector<8x3xf32> to vector<8x1xf32>
    %12 = vector.extract_strided_slice %5 {offsets = [1, 0], sizes = [1, 256], strides = [1, 1]} : vector<3x256xf32> to vector<1x256xf32>
    %13 = vector.broadcast %11 : vector<8x1xf32> to vector<8x256xf32>
    %14 = vector.broadcast %12 : vector<1x256xf32> to vector<8x256xf32>
    %15 = arith.mulf %13, %14 : vector<8x256xf32>
    %16 = arith.addf %10, %15 : vector<8x256xf32>
    %17 = vector.extract_strided_slice %4 {offsets = [0, 2], sizes = [8, 1], strides = [1, 1]} : vector<8x3xf32> to vector<8x1xf32>
    %18 = vector.extract_strided_slice %5 {offsets = [2, 0], sizes = [1, 256], strides = [1, 1]} : vector<3x256xf32> to vector<1x256xf32>
    %19 = vector.broadcast %17 : vector<8x1xf32> to vector<8x256xf32>
    %20 = vector.broadcast %18 : vector<1x256xf32> to vector<8x256xf32>
    %21 = arith.mulf %19, %20 : vector<8x256xf32>
    %22 = arith.addf %16, %21 : vector<8x256xf32>
    %23 = arith.addf %3, %22 : vector<8x256xf32>
    %c0_7 = arith.constant 0 : index
    %c0_8 = arith.constant 0 : index
    %24 = vector.load %arg5[%c0_7, %c0_8] : memref<1x256xf32, #tpu.memory_space<vmem>>, vector<1x256xf32>
    %25 = vector.broadcast %24 : vector<1x256xf32> to vector<8x256xf32>
    %26 = arith.addf %23, %25 : vector<8x256xf32>
    %cst_9 = arith.constant 0.000000e+00 : f32
    %27 = vector.broadcast %cst_9 : f32 to vector<8x256xf32>
    %28 = arith.maximumf %26, %27 : vector<8x256xf32>
    %c0_10 = arith.constant 0 : index
    %c0_11 = arith.constant 0 : index
    %29 = vector.load %arg6[%c0_10, %c0_11] : memref<256x8xf32, #tpu.memory_space<vmem>>, vector<256x8xf32>
    %cst_12 = arith.constant dense<0.000000e+00> : vector<8x8xf32>
    %30 = tpu.matmul %28, %29, %cst_12 {dimension_numbers = #tpu.dot_dimension_numbers<[1], [0], [0], [1], [0, 0, 1, 1], [], []>} : vector<8x256xf32>, vector<256x8xf32>, vector<8x8xf32> -> vector<8x8xf32>
    %c0_13 = arith.constant 0 : index
    %c0_14 = arith.constant 0 : index
    %31 = vector.load %arg7[%c0_13, %c0_14] : memref<1x8xf32, #tpu.memory_space<vmem>>, vector<1x8xf32>
    %32 = vector.broadcast %31 : vector<1x8xf32> to vector<8x8xf32>
    %33 = arith.addf %30, %32 : vector<8x8xf32>
    %c0_15 = arith.constant 0 : index
    %c0_16 = arith.constant 0 : index
    %34 = vector.load %arg8[%c0_15, %c0_16] : memref<8x8xf32, #tpu.memory_space<vmem>>, vector<8x8xf32>
    tpu.vector_store %arg8[%c0_15, %c0_16], %33 {strides = array<i32>} : memref<8x8xf32, #tpu.memory_space<vmem>>, vector<8x8xf32>,
    return
  }
  func.func @transform_0(%arg0: i32) -> (i32, i32) {
    %c0_i32 = arith.constant 0 : i32
    %c0_i32_0 = arith.constant 0 : i32
    return %arg0, %c0_i32 : i32, i32
  }
  func.func @transform_1(%arg0: i32) -> (i32, i32) {
    %c0_i32 = arith.constant 0 : i32
    %c0_i32_0 = arith.constant 0 : i32
    return %arg0, %c0_i32 : i32, i32
  }
  func.func @transform_2(%arg0: i32) -> (i32, i32) {
    %c0_i32 = arith.constant 0 : i32
    %c0_i32_0 = arith.constant 0 : i32
    %c0_i32_1 = arith.constant 0 : i32
    return %c0_i32, %c0_i32_0 : i32, i32
  }
  func.func @transform_3(%arg0: i32) -> (i32, i32) {
    %c0_i32 = arith.constant 0 : i32
    %c0_i32_0 = arith.constant 0 : i32
    %c0_i32_1 = arith.constant 0 : i32
    return %c0_i32, %c0_i32_0 : i32, i32
  }
  func.func @transform_4(%arg0: i32) -> (i32, i32) {
    %c0_i32 = arith.constant 0 : i32
    %c0_i32_0 = arith.constant 0 : i32
    %c0_i32_1 = arith.constant 0 : i32
    return %c0_i32, %c0_i32_0 : i32, i32
  }
  func.func @transform_5(%arg0: i32) -> (i32, i32) {
    %c0_i32 = arith.constant 0 : i32
    %c0_i32_0 = arith.constant 0 : i32
    %c0_i32_1 = arith.constant 0 : i32
    return %c0_i32, %c0_i32_0 : i32, i32
  }
  func.func @transform_6(%arg0: i32) -> (i32, i32) {
    %c0_i32 = arith.constant 0 : i32
    %c0_i32_0 = arith.constant 0 : i32
    %c0_i32_1 = arith.constant 0 : i32
    return %c0_i32, %c0_i32_0 : i32, i32
  }
  func.func @transform_7(%arg0: i32) -> (i32, i32) {
    %c0_i32 = arith.constant 0 : i32
    %c0_i32_0 = arith.constant 0 : i32
    return %arg0, %c0_i32 : i32, i32
  }
}

</mosaic_0001>

<llo_original>
// kernel: linear_sensor_forward.1
$region0: #{linear_sensor_forward.1}
  #allocation0 [shape = 'u32[]', space=smem, size = 0x4, offset = 0x4, fixed_abs, tag = 'smem constant byte address 0x4 - core index']
  #allocation1 [shape = 'u32[144,128]{1,0:T(1,128)}', space=vmem, size = 0x12000, scoped, tag = 'internal scratch']
  %s0 = inlined_call_operand.vmem [shape: f32[8,3], index: 0, kind: input, shape index: {}]
  %s1 = inlined_call_operand.vmem [shape: f32[8,1280], index: 1, kind: input, shape index: {}]
  %s2 = inlined_call_operand.vmem [shape: f32[3,256], index: 2, kind: input, shape index: {}]
  %s3 = inlined_call_operand.hbm [shape: bf16[1280,256], index: 3, kind: input, shape index: {}]
  %s4 = inlined_call_operand.vmem [shape: f32[1,256], index: 4, kind: input, shape index: {}]
  %s5 = inlined_call_operand.vmem [shape: f32[256,8], index: 5, kind: input, shape index: {}]
  %s6 = inlined_call_operand.vmem [shape: f32[1,8], index: 6, kind: input, shape index: {}]
  %s7 = inlined_call_operand.vmem [shape: f32[8,8], index: 7, kind: output, shape index: {}]
  %s8 = sld [smem:[#allocation0]]
  $region42: #{linear_sensor_forward.1} parent=0
    _
  %s10 = ssub.s32 1, %s8
  %s11 = scalar_select 0, %s10, %s8
  $region1: #{linear_sensor_forward.1} parent=0
    #allocation2 [shape = 'u8[655360]{0}', space=vmem, size = 0xa0000, scoped, tag = 'input window, operand 3, single buffered']
    #allocation3 [shape = 's32[1]{0}', space=sflag, size = 0x4, scoped, tag = 'scoped memory for linear_sensor_forward.1']
    %12 = vsyncpa [#allocation3], 0
    // Predicated region
    $region2: #{linear_sensor_forward.1} parent=1 // pred_check
      _
    $region3: #{linear_sensor_forward.1} parent=1 // pred_check_branch
      %14 = sbr.rel (0) target = $region5
    $region4: #{linear_sensor_forward.1} parent=1 // pred_region
      _
    $region5: #{linear_sensor_forward.1} parent=1 // pred_fallthru
      _
    // Predicated region
    $region6: #{linear_sensor_forward.1} parent=1 // pred_check
      _
    $region7: #{linear_sensor_forward.1} parent=1 // pred_check_branch
      %16 = sbr.rel (0) target = $region9
    $region8: #{linear_sensor_forward.1} parent=1 // pred_region
      _
    $region9: #{linear_sensor_forward.1} parent=1 // pred_fallthru
      _
    // Predicated region
    $region10: #{linear_sensor_forward.1} parent=1 // pred_check
      _
    $region11: #{linear_sensor_forward.1} parent=1 // pred_check_branch
      %18 = sbr.rel (0) target = $region13
    $region12: #{linear_sensor_forward.1} parent=1 // pred_region
      _
    $region13: #{linear_sensor_forward.1} parent=1 // pred_fallthru
      _
    // Predicated region
    $region14: #{linear_sensor_forward.1} parent=1 // pred_check
      _
    $region15: #{linear_sensor_forward.1} parent=1 // pred_check_branch
      %20 = sbr.rel (0) target = $region17
    $region16: #{linear_sensor_forward.1} parent=1 // pred_region
      %s22 = ssub.s32 20480, 20480
      %23 = vsyncadd [#allocation3], %s22
      %s24 = sshll.u32 [#allocation2], 4
      %s25 = int_to_ptr.vmem [resolvable:$true] %s24
      %30 = dma.hbm_to_vmem [thread:$0]  %s3, 20480, %s25, [#allocation3], 128, 128, 8
    $region17: #{linear_sensor_forward.1} parent=1 // pred_fallthru
      _
    // Predicated region
    $region18: #{linear_sensor_forward.1} parent=1 // pred_check
      _
    $region19: #{linear_sensor_forward.1} parent=1 // pred_check_branch
      %32 = sbr.rel (0) target = $region21
    $region20: #{linear_sensor_forward.1} parent=1 // pred_region
      _
    $region21: #{linear_sensor_forward.1} parent=1 // pred_fallthru
      _
    // Predicated region
    $region22: #{linear_sensor_forward.1} parent=1 // pred_check
      _
    $region23: #{linear_sensor_forward.1} parent=1 // pred_check_branch
      %34 = sbr.rel (0) target = $region25
    $region24: #{linear_sensor_forward.1} parent=1 // pred_region
      _
    $region25: #{linear_sensor_forward.1} parent=1 // pred_fallthru
      _
    // Predicated region
    $region26: #{linear_sensor_forward.1} parent=1 // pred_check
      _
    $region27: #{linear_sensor_forward.1} parent=1 // pred_check_branch
      %36 = sbr.rel (0) target = $region29
    $region28: #{linear_sensor_forward.1} parent=1 // pred_region
      _
    $region29: #{linear_sensor_forward.1} parent=1 // pred_fallthru
      _
    // Predicated region
    $region30: #{linear_sensor_forward.1} parent=1 // pred_check
      _
    $region31: #{linear_sensor_forward.1} parent=1 // pred_check_branch
      %38 = sbr.rel (0) target = $region33
    $region32: #{linear_sensor_forward.1} parent=1 // pred_region
      %39 = dma.done [#allocation3], 20480
    $region33: #{linear_sensor_forward.1} parent=1 // pred_fallthru
      _
    %v40 = vld [vmem:[%s1] sm:$0xff]
    %v41 = vld [vmem:[%s1 + $0x8] sm:$0xff]
    %v42 = vld [vmem:[%s1 + $0x10] sm:$0xff]
    %v43 = vld [vmem:[%s1 + $0x18] sm:$0xff]
    %v44 = vld [vmem:[%s1 + $0x20] sm:$0xff]
    %v45 = vld [vmem:[%s1 + $0x28] sm:$0xff]
    %v46 = vld [vmem:[%s1 + $0x30] sm:$0xff]
    %v47 = vld [vmem:[%s1 + $0x38] sm:$0xff]
    %v48 = vld [vmem:[%s1 + $0x40] sm:$0xff]
    %v49 = vld [vmem:[%s1 + $0x48] sm:$0xff]
    %v50 = vpack.c.bf16 %v40, %v40
    %v51 = vpack.c.bf16 %v41, %v41
    %v52 = vpack.c.bf16 %v42, %v42
    %v53 = vpack.c.bf16 %v43, %v43
    %v54 = vpack.c.bf16 %v44, %v44
    %v55 = vpack.c.bf16 %v45, %v45
    %v56 = vpack.c.bf16 %v46, %v46
    %v57 = vpack.c.bf16 %v47, %v47
    %v58 = vpack.c.bf16 %v48, %v48
    %v59 = vpack.c.bf16 %v49, %v49
    %v60 = vld [vmem:[#allocation2] sm:$0xff]
    %v61 = vld [vmem:[#allocation2 + $0x8] sm:$0xff]
    %v62 = vld [vmem:[#allocation2 + $0x10] sm:$0xff]
    %v63 = vld [vmem:[#allocation2 + $0x18] sm:$0xff]
    %v64 = vld [vmem:[#allocation2 + $0x20] sm:$0xff]
    %v65 = vld [vmem:[#allocation2 + $0x28] sm:$0xff]
    %v66 = vld [vmem:[#allocation2 + $0x30] sm:$0xff]
    %v67 = vld [vmem:[#allocation2 + $0x38] sm:$0xff]
    %v68 = vld [vmem:[#allocation2 + $0x40] sm:$0xff]
    %v69 = vld [vmem:[#allocation2 + $0x48] sm:$0xff]
    %v70 = vld [vmem:[#allocation2 + $0x50] sm:$0xff]
    %v71 = vld [vmem:[#allocation2 + $0x58] sm:$0xff]
    %v72 = vld [vmem:[#allocation2 + $0x60] sm:$0xff]
    %v73 = vld [vmem:[#allocation2 + $0x68] sm:$0xff]
    %v74 = vld [vmem:[#allocation2 + $0x70] sm:$0xff]
    %v75 = vld [vmem:[#allocation2 + $0x78] sm:$0xff]
    %v76 = vld [vmem:[#allocation2 + $0x80] sm:$0xff]
    %v77 = vld [vmem:[#allocation2 + $0x88] sm:$0xff]
    %v78 = vld [vmem:[#allocation2 + $0x90] sm:$0xff]
    %v79 = vld [vmem:[#allocation2 + $0x98] sm:$0xff]
    %v80 = vld [vmem:[#allocation2 + $0xa0] sm:$0xff]
    %v81 = vld [vmem:[#allocation2 + $0xa8] sm:$0xff]
    %v82 = vld [vmem:[#allocation2 + $0xb0] sm:$0xff]
    %v83 = vld [vmem:[#allocation2 + $0xb8] sm:$0xff]
    %v84 = vld [vmem:[#allocation2 + $0xc0] sm:$0xff]
    %v85 = vld [vmem:[#allocation2 + $0xc8] sm:$0xff]
    %v86 = vld [vmem:[#allocation2 + $0xd0] sm:$0xff]
    %v87 = vld [vmem:[#allocation2 + $0xd8] sm:$0xff]
    %v88 = vld [vmem:[#allocation2 + $0xe0] sm:$0xff]
    %v89 = vld [vmem:[#allocation2 + $0xe8] sm:$0xff]
    %v90 = vld [vmem:[#allocation2 + $0xf0] sm:$0xff]
    %v91 = vld [vmem:[#allocation2 + $0xf8] sm:$0xff]
    %v92 = vld [vmem:[#allocation2 + $0x100] sm:$0xff]
    %v93 = vld [vmem:[#allocation2 + $0x108] sm:$0xff]
    %v94 = vld [vmem:[#allocation2 + $0x110] sm:$0xff]
    %v95 = vld [vmem:[#allocation2 + $0x118] sm:$0xff]
    %v96 = vld [vmem:[#allocation2 + $0x120] sm:$0xff]
    %v97 = vld [vmem:[#allocation2 + $0x128] sm:$0xff]
    %v98 = vld [vmem:[#allocation2 + $0x130] sm:$0xff]
    %v99 = vld [vmem:[#allocation2 + $0x138] sm:$0xff]
    %v100 = vld [vmem:[#allocation2 + $0x140] sm:$0xff]
    %v101 = vld [vmem:[#allocation2 + $0x148] sm:$0xff]
    %v102 = vld [vmem:[#allocation2 + $0x150] sm:$0xff]
    %v103 = vld [vmem:[#allocation2 + $0x158] sm:$0xff]
    %v104 = vld [vmem:[#allocation2 + $0x160] sm:$0xff]
    %v105 = vld [vmem:[#allocation2 + $0x168] sm:$0xff]
    %v106 = vld [vmem:[#allocation2 + $0x170] sm:$0xff]
    %v107 = vld [vmem:[#allocation2 + $0x178] sm:$0xff]
    %v108 = vld [vmem:[#allocation2 + $0x180] sm:$0xff]
    %v109 = vld [vmem:[#allocation2 + $0x188] sm:$0xff]
    %v110 = vld [vmem:[#allocation2 + $0x190] sm:$0xff]
    %v111 = vld [vmem:[#allocation2 + $0x198] sm:$0xff]
    %v112 = vld [vmem:[#allocation2 + $0x1a0] sm:$0xff]
    %v113 = vld [vmem:[#allocation2 + $0x1a8] sm:$0xff]
    %v114 = vld [vmem:[#allocation2 + $0x1b0] sm:$0xff]
    %v115 = vld [vmem:[#allocation2 + $0x1b8] sm:$0xff]
    %v116 = vld [vmem:[#allocation2 + $0x1c0] sm:$0xff]
    %v117 = vld [vmem:[#allocation2 + $0x1c8] sm:$0xff]
    %v118 = vld [vmem:[#allocation2 + $0x1d0] sm:$0xff]
    %v119 = vld [vmem:[#allocation2 + $0x1d8] sm:$0xff]
    %v120 = vld [vmem:[#allocation2 + $0x1e0] sm:$0xff]
    %v121 = vld [vmem:[#allocation2 + $0x1e8] sm:$0xff]
    %v122 = vld [vmem:[#allocation2 + $0x1f0] sm:$0xff]
    %v123 = vld [vmem:[#allocation2 + $0x1f8] sm:$0xff]
    %v124 = vld [vmem:[#allocation2 + $0x200] sm:$0xff]
    %v125 = vld [vmem:[#allocation2 + $0x208] sm:$0xff]
    %v126 = vld [vmem:[#allocation2 + $0x210] sm:$0xff]
    %v127 = vld [vmem:[#allocation2 + $0x218] sm:$0xff]
    %v128 = vld [vmem:[#allocation2 + $0x220] sm:$0xff]
    %v129 = vld [vmem:[#allocation2 + $0x228] sm:$0xff]
    %v130 = vld [vmem:[#allocation2 + $0x230] sm:$0xff]
    %v131 = vld [vmem:[#allocation2 + $0x238] sm:$0xff]
    %v132 = vld [vmem:[#allocation2 + $0x240] sm:$0xff]
    %v133 = vld [vmem:[#allocation2 + $0x248] sm:$0xff]
    %v134 = vld [vmem:[#allocation2 + $0x250] sm:$0xff]
    %v135 = vld [vmem:[#allocation2 + $0x258] sm:$0xff]
    %v136 = vld [vmem:[#allocation2 + $0x260] sm:$0xff]
    %v137 = vld [vmem:[#allocation2 + $0x268] sm:$0xff]
    %v138 = vld [vmem:[#allocation2 + $0x270] sm:$0xff]
    %v139 = vld [vmem:[#allocation2 + $0x278] sm:$0xff]
    %v140 = vld [vmem:[#allocation2 + $0x280] sm:$0xff]
    %v141 = vld [vmem:[#allocation2 + $0x288] sm:$0xff]
    %v142 = vld [vmem:[#allocation2 + $0x290] sm:$0xff]
    %v143 = vld [vmem:[#allocation2 + $0x298] sm:$0xff]
    %v144 = vld [vmem:[#allocation2 + $0x2a0] sm:$0xff]
    %v145 = vld [vmem:[#allocation2 + $0x2a8] sm:$0xff]
    %v146 = vld [vmem:[#allocation2 + $0x2b0] sm:$0xff]
    %v147 = vld [vmem:[#allocation2 + $0x2b8] sm:$0xff]
    %v148 = vld [vmem:[#allocation2 + $0x2c0] sm:$0xff]
    %v149 = vld [vmem:[#allocation2 + $0x2c8] sm:$0xff]
    %v150 = vld [vmem:[#allocation2 + $0x2d0] sm:$0xff]
    %v151 = vld [vmem:[#allocation2 + $0x2d8] sm:$0xff]
    %v152 = vld [vmem:[#allocation2 + $0x2e0] sm:$0xff]
    %v153 = vld [vmem:[#allocation2 + $0x2e8] sm:$0xff]
    %v154 = vld [vmem:[#allocation2 + $0x2f0] sm:$0xff]
    %v155 = vld [vmem:[#allocation2 + $0x2f8] sm:$0xff]
    %v156 = vld [vmem:[#allocation2 + $0x300] sm:$0xff]
    %v157 = vld [vmem:[#allocation2 + $0x308] sm:$0xff]
    %v158 = vld [vmem:[#allocation2 + $0x310] sm:$0xff]
    %v159 = vld [vmem:[#allocation2 + $0x318] sm:$0xff]
    %v160 = vld [vmem:[#allocation2 + $0x320] sm:$0xff]
    %v161 = vld [vmem:[#allocation2 + $0x328] sm:$0xff]
    %v162 = vld [vmem:[#allocation2 + $0x330] sm:$0xff]
    %v163 = vld [vmem:[#allocation2 + $0x338] sm:$0xff]
    %v164 = vld [vmem:[#allocation2 + $0x340] sm:$0xff]
    %v165 = vld [vmem:[#allocation2 + $0x348] sm:$0xff]
    %v166 = vld [vmem:[#allocation2 + $0x350] sm:$0xff]
    %v167 = vld [vmem:[#allocation2 + $0x358] sm:$0xff]
    %v168 = vld [vmem:[#allocation2 + $0x360] sm:$0xff]
    %v169 = vld [vmem:[#allocation2 + $0x368] sm:$0xff]
    %v170 = vld [vmem:[#allocation2 + $0x370] sm:$0xff]
    %v171 = vld [vmem:[#allocation2 + $0x378] sm:$0xff]
    %v172 = vld [vmem:[#allocation2 + $0x380] sm:$0xff]
    %v173 = vld [vmem:[#allocation2 + $0x388] sm:$0xff]
    %v174 = vld [vmem:[#allocation2 + $0x390] sm:$0xff]
    %v175 = vld [vmem:[#allocation2 + $0x398] sm:$0xff]
    %v176 = vld [vmem:[#allocation2 + $0x3a0] sm:$0xff]
    %v177 = vld [vmem:[#allocation2 + $0x3a8] sm:$0xff]
    %v178 = vld [vmem:[#allocation2 + $0x3b0] sm:$0xff]
    %v179 = vld [vmem:[#allocation2 + $0x3b8] sm:$0xff]
    %v180 = vld [vmem:[#allocation2 + $0x3c0] sm:$0xff]
    %v181 = vld [vmem:[#allocation2 + $0x3c8] sm:$0xff]
    %v182 = vld [vmem:[#allocation2 + $0x3d0] sm:$0xff]
    %v183 = vld [vmem:[#allocation2 + $0x3d8] sm:$0xff]
    %v184 = vld [vmem:[#allocation2 + $0x3e0] sm:$0xff]
    %v185 = vld [vmem:[#allocation2 + $0x3e8] sm:$0xff]
    %v186 = vld [vmem:[#allocation2 + $0x3f0] sm:$0xff]
    %v187 = vld [vmem:[#allocation2 + $0x3f8] sm:$0xff]
    %v188 = vld [vmem:[#allocation2 + $0x400] sm:$0xff]
    %v189 = vld [vmem:[#allocation2 + $0x408] sm:$0xff]
    %v190 = vld [vmem:[#allocation2 + $0x410] sm:$0xff]
    %v191 = vld [vmem:[#allocation2 + $0x418] sm:$0xff]
    %v192 = vld [vmem:[#allocation2 + $0x420] sm:$0xff]
    %v193 = vld [vmem:[#allocation2 + $0x428] sm:$0xff]
    %v194 = vld [vmem:[#allocation2 + $0x430] sm:$0xff]
    %v195 = vld [vmem:[#allocation2 + $0x438] sm:$0xff]
    %v196 = vld [vmem:[#allocation2 + $0x440] sm:$0xff]
    %v197 = vld [vmem:[#allocation2 + $0x448] sm:$0xff]
    %v198 = vld [vmem:[#allocation2 + $0x450] sm:$0xff]
    %v199 = vld [vmem:[#allocation2 + $0x458] sm:$0xff]
    %v200 = vld [vmem:[#allocation2 + $0x460] sm:$0xff]
    %v201 = vld [vmem:[#allocation2 + $0x468] sm:$0xff]
    %v202 = vld [vmem:[#allocation2 + $0x470] sm:$0xff]
    %v203 = vld [vmem:[#allocation2 + $0x478] sm:$0xff]
    %v204 = vld [vmem:[#allocation2 + $0x480] sm:$0xff]
    %v205 = vld [vmem:[#allocation2 + $0x488] sm:$0xff]
    %v206 = vld [vmem:[#allocation2 + $0x490] sm:$0xff]
    %v207 = vld [vmem:[#allocation2 + $0x498] sm:$0xff]
    %v208 = vld [vmem:[#allocation2 + $0x4a0] sm:$0xff]
    %v209 = vld [vmem:[#allocation2 + $0x4a8] sm:$0xff]
    %v210 = vld [vmem:[#allocation2 + $0x4b0] sm:$0xff]
    %v211 = vld [vmem:[#allocation2 + $0x4b8] sm:$0xff]
    %v212 = vld [vmem:[#allocation2 + $0x4c0] sm:$0xff]
    %v213 = vld [vmem:[#allocation2 + $0x4c8] sm:$0xff]
    %v214 = vld [vmem:[#allocation2 + $0x4d0] sm:$0xff]
    %v215 = vld [vmem:[#allocation2 + $0x4d8] sm:$0xff]
    %v216 = vld [vmem:[#allocation2 + $0x4e0] sm:$0xff]
    %v217 = vld [vmem:[#allocation2 + $0x4e8] sm:$0xff]
    %v218 = vld [vmem:[#allocation2 + $0x4f0] sm:$0xff]
    %v219 = vld [vmem:[#allocation2 + $0x4f8] sm:$0xff]
    %v220 = vld [vmem:[%s0] sm:$0xff]
    %v221 = vld [vmem:[%s2] sm:$0x77]
    %223 = vset.pattern.permute.xlu0 0
    %224 = vperm.xlu0 %223, %v220
    %v225 = vpop.permute.xlu0 %224
    %v228 = vlaneseq
    %v229 = vshrl.u32 %v228, 7
    %v230 = vsub.s32 0, %v229
    %v231 = vrot.slane %v221, %v230
    %v232 = vlaneseq
    %v233 = vshrl.u32 %v232, 7
    %v234 = vsub.s32 4, %v233
    %v235 = vrot.slane %v221, %v234
    %v238 = vlaneseq
    %v239 = vshrl.u32 %v238, 7
    %v240 = vsub.s32 0, %v239
    %v241 = vrot.slane %v231, %v240
    %v242 = vlaneseq
    %v243 = vshrl.u32 %v242, 7
    %v244 = vsub.s32 0, %v243
    %v245 = vrot.slane %v235, %v244
    %v246 = vmul.f32 %v225, %v241
    %v247 = vmul.f32 %v225, %v245
    %248 = vset.pattern.permute.xlu0 1
    %249 = vperm.xlu0 %248, %v220
    %v250 = vpop.permute.xlu0 %249
    %v252 = vlaneseq
    %v253 = vshrl.u32 %v252, 7
    %v254 = vsub.s32 1, %v253
    %v255 = vrot.slane %v221, %v254
    %v256 = vlaneseq
    %v257 = vshrl.u32 %v256, 7
    %v258 = vsub.s32 5, %v257
    %v259 = vrot.slane %v221, %v258
    %v262 = vlaneseq
    %v263 = vshrl.u32 %v262, 7
    %v264 = vsub.s32 1, %v263
    %v265 = vrot.slane %v255, %v264
    %v266 = vlaneseq
    %v267 = vshrl.u32 %v266, 7
    %v268 = vsub.s32 1, %v267
    %v269 = vrot.slane %v259, %v268
    %v270 = vmul.f32 %v250, %v265
    %v271 = vmul.f32 %v250, %v269
    %v272 = vadd.f32 %v246, %v270
    %v273 = vadd.f32 %v247, %v271
    %274 = vset.pattern.permute.xlu0 2
    %275 = vperm.xlu0 %274, %v220
    %v276 = vpop.permute.xlu0 %275
    %v278 = vlaneseq
    %v279 = vshrl.u32 %v278, 7
    %v280 = vsub.s32 2, %v279
    %v281 = vrot.slane %v221, %v280
    %v282 = vlaneseq
    %v283 = vshrl.u32 %v282, 7
    %v284 = vsub.s32 6, %v283
    %v285 = vrot.slane %v221, %v284
    %v288 = vlaneseq
    %v289 = vshrl.u32 %v288, 7
    %v290 = vsub.s32 2, %v289
    %v291 = vrot.slane %v281, %v290
    %v292 = vlaneseq
    %v293 = vshrl.u32 %v292, 7
    %v294 = vsub.s32 2, %v293
    %v295 = vrot.slane %v285, %v294
    %v296 = vmul.f32 %v276, %v291
    %v297 = vmul.f32 %v276, %v295
    %v298 = vadd.f32 %v272, %v296
    %v299 = vadd.f32 %v273, %v297
    %v460 = vunpack.c.l.b16 %v60
    %v461 = vunpack.c.h.b16 %v60
    %v462 = vunpack.c.l.b16 %v61
    %v463 = vunpack.c.h.b16 %v61
    %v464 = vunpack.c.l.b16 %v62
    %v465 = vunpack.c.h.b16 %v62
    %v466 = vunpack.c.l.b16 %v63
    %v467 = vunpack.c.h.b16 %v63
    %v468 = vunpack.c.l.b16 %v64
    %v469 = vunpack.c.h.b16 %v64
    %v470 = vunpack.c.l.b16 %v65
    %v471 = vunpack.c.h.b16 %v65
    %v472 = vunpack.c.l.b16 %v66
    %v473 = vunpack.c.h.b16 %v66
    %v474 = vunpack.c.l.b16 %v67
    %v475 = vunpack.c.h.b16 %v67
    %v476 = vunpack.c.l.b16 %v68
    %v477 = vunpack.c.h.b16 %v68
    %v478 = vunpack.c.l.b16 %v69
    %v479 = vunpack.c.h.b16 %v69
    %v480 = vunpack.c.l.b16 %v70
    %v481 = vunpack.c.h.b16 %v70
    %v482 = vunpack.c.l.b16 %v71
    %v483 = vunpack.c.h.b16 %v71
    %v484 = vunpack.c.l.b16 %v72
    %v485 = vunpack.c.h.b16 %v72
    %v486 = vunpack.c.l.b16 %v73
    %v487 = vunpack.c.h.b16 %v73
    %v488 = vunpack.c.l.b16 %v74
    %v489 = vunpack.c.h.b16 %v74
    %v490 = vunpack.c.l.b16 %v75
    %v491 = vunpack.c.h.b16 %v75
    %v492 = vunpack.c.l.b16 %v76
    %v493 = vunpack.c.h.b16 %v76
    %v494 = vunpack.c.l.b16 %v77
    %v495 = vunpack.c.h.b16 %v77
    %v496 = vunpack.c.l.b16 %v78
    %v497 = vunpack.c.h.b16 %v78
    %v498 = vunpack.c.l.b16 %v79
    %v499 = vunpack.c.h.b16 %v79
    %v500 = vunpack.c.l.b16 %v80
    %v501 = vunpack.c.h.b16 %v80
    %v502 = vunpack.c.l.b16 %v81
    %v503 = vunpack.c.h.b16 %v81
    %v504 = vunpack.c.l.b16 %v82
    %v505 = vunpack.c.h.b16 %v82
    %v506 = vunpack.c.l.b16 %v83
    %v507 = vunpack.c.h.b16 %v83
    %v508 = vunpack.c.l.b16 %v84
    %v509 = vunpack.c.h.b16 %v84
    %v510 = vunpack.c.l.b16 %v85
    %v511 = vunpack.c.h.b16 %v85
    %v512 = vunpack.c.l.b16 %v86
    %v513 = vunpack.c.h.b16 %v86
    %v514 = vunpack.c.l.b16 %v87
    %v515 = vunpack.c.h.b16 %v87
    %v516 = vunpack.c.l.b16 %v88
    %v517 = vunpack.c.h.b16 %v88
    %v518 = vunpack.c.l.b16 %v89
    %v519 = vunpack.c.h.b16 %v89
    %v520 = vunpack.c.l.b16 %v90
    %v521 = vunpack.c.h.b16 %v90
    %v522 = vunpack.c.l.b16 %v91
    %v523 = vunpack.c.h.b16 %v91
    %v524 = vunpack.c.l.b16 %v92
    %v525 = vunpack.c.h.b16 %v92
    %v526 = vunpack.c.l.b16 %v93
    %v527 = vunpack.c.h.b16 %v93
    %v528 = vunpack.c.l.b16 %v94
    %v529 = vunpack.c.h.b16 %v94
    %v530 = vunpack.c.l.b16 %v95
    %v531 = vunpack.c.h.b16 %v95
    %v532 = vunpack.c.l.b16 %v96
    %v533 = vunpack.c.h.b16 %v96
    %v534 = vunpack.c.l.b16 %v97
    %v535 = vunpack.c.h.b16 %v97
    %v536 = vunpack.c.l.b16 %v98
    %v537 = vunpack.c.h.b16 %v98
    %v538 = vunpack.c.l.b16 %v99
    %v539 = vunpack.c.h.b16 %v99
    %v540 = vunpack.c.l.b16 %v100
    %v541 = vunpack.c.h.b16 %v100
    %v542 = vunpack.c.l.b16 %v101
    %v543 = vunpack.c.h.b16 %v101
    %v544 = vunpack.c.l.b16 %v102
    %v545 = vunpack.c.h.b16 %v102
    %v546 = vunpack.c.l.b16 %v103
    %v547 = vunpack.c.h.b16 %v103
    %v548 = vunpack.c.l.b16 %v104
    %v549 = vunpack.c.h.b16 %v104
    %v550 = vunpack.c.l.b16 %v105
    %v551 = vunpack.c.h.b16 %v105
    %v552 = vunpack.c.l.b16 %v106
    %v553 = vunpack.c.h.b16 %v106
    %v554 = vunpack.c.l.b16 %v107
    %v555 = vunpack.c.h.b16 %v107
    %v556 = vunpack.c.l.b16 %v108
    %v557 = vunpack.c.h.b16 %v108
    %v558 = vunpack.c.l.b16 %v109
    %v559 = vunpack.c.h.b16 %v109
    %v560 = vunpack.c.l.b16 %v110
    %v561 = vunpack.c.h.b16 %v110
    %v562 = vunpack.c.l.b16 %v111
    %v563 = vunpack.c.h.b16 %v111
    %v564 = vunpack.c.l.b16 %v112
    %v565 = vunpack.c.h.b16 %v112
    %v566 = vunpack.c.l.b16 %v113
    %v567 = vunpack.c.h.b16 %v113
    %v568 = vunpack.c.l.b16 %v114
    %v569 = vunpack.c.h.b16 %v114
    %v570 = vunpack.c.l.b16 %v115
    %v571 = vunpack.c.h.b16 %v115
    %v572 = vunpack.c.l.b16 %v116
    %v573 = vunpack.c.h.b16 %v116
    %v574 = vunpack.c.l.b16 %v117
    %v575 = vunpack.c.h.b16 %v117
    %v576 = vunpack.c.l.b16 %v118
    %v577 = vunpack.c.h.b16 %v118
    %v578 = vunpack.c.l.b16 %v119
    %v579 = vunpack.c.h.b16 %v119
    %v580 = vunpack.c.l.b16 %v120
    %v581 = vunpack.c.h.b16 %v120
    %v582 = vunpack.c.l.b16 %v121
    %v583 = vunpack.c.h.b16 %v121
    %v584 = vunpack.c.l.b16 %v122
    %v585 = vunpack.c.h.b16 %v122
    %v586 = vunpack.c.l.b16 %v123
    %v587 = vunpack.c.h.b16 %v123
    %v588 = vunpack.c.l.b16 %v124
    %v589 = vunpack.c.h.b16 %v124
    %v590 = vunpack.c.l.b16 %v125
    %v591 = vunpack.c.h.b16 %v125
    %v592 = vunpack.c.l.b16 %v126
    %v593 = vunpack.c.h.b16 %v126
    %v594 = vunpack.c.l.b16 %v127
    %v595 = vunpack.c.h.b16 %v127
    %v596 = vunpack.c.l.b16 %v128
    %v597 = vunpack.c.h.b16 %v128
    %v598 = vunpack.c.l.b16 %v129
    %v599 = vunpack.c.h.b16 %v129
    %v600 = vunpack.c.l.b16 %v130
    %v601 = vunpack.c.h.b16 %v130
    %v602 = vunpack.c.l.b16 %v131
    %v603 = vunpack.c.h.b16 %v131
    %v604 = vunpack.c.l.b16 %v132
    %v605 = vunpack.c.h.b16 %v132
    %v606 = vunpack.c.l.b16 %v133
    %v607 = vunpack.c.h.b16 %v133
    %v608 = vunpack.c.l.b16 %v134
    %v609 = vunpack.c.h.b16 %v134
    %v610 = vunpack.c.l.b16 %v135
    %v611 = vunpack.c.h.b16 %v135
    %v612 = vunpack.c.l.b16 %v136
    %v613 = vunpack.c.h.b16 %v136
    %v614 = vunpack.c.l.b16 %v137
    %v615 = vunpack.c.h.b16 %v137
    %v616 = vunpack.c.l.b16 %v138
    %v617 = vunpack.c.h.b16 %v138
    %v618 = vunpack.c.l.b16 %v139
    %v619 = vunpack.c.h.b16 %v139
    %v620 = vunpack.c.l.b16 %v140
    %v621 = vunpack.c.h.b16 %v140
    %v622 = vunpack.c.l.b16 %v141
    %v623 = vunpack.c.h.b16 %v141
    %v624 = vunpack.c.l.b16 %v142
    %v625 = vunpack.c.h.b16 %v142
    %v626 = vunpack.c.l.b16 %v143
    %v627 = vunpack.c.h.b16 %v143
    %v628 = vunpack.c.l.b16 %v144
    %v629 = vunpack.c.h.b16 %v144
    %v630 = vunpack.c.l.b16 %v145
    %v631 = vunpack.c.h.b16 %v145
    %v632 = vunpack.c.l.b16 %v146
    %v633 = vunpack.c.h.b16 %v146
    %v634 = vunpack.c.l.b16 %v147
    %v635 = vunpack.c.h.b16 %v147
    %v636 = vunpack.c.l.b16 %v148
    %v637 = vunpack.c.h.b16 %v148
    %v638 = vunpack.c.l.b16 %v149
    %v639 = vunpack.c.h.b16 %v149
    %v640 = vunpack.c.l.b16 %v150
    %v641 = vunpack.c.h.b16 %v150
    %v642 = vunpack.c.l.b16 %v151
    %v643 = vunpack.c.h.b16 %v151
    %v644 = vunpack.c.l.b16 %v152
    %v645 = vunpack.c.h.b16 %v152
    %v646 = vunpack.c.l.b16 %v153
    %v647 = vunpack.c.h.b16 %v153
    %v648 = vunpack.c.l.b16 %v154
    %v649 = vunpack.c.h.b16 %v154
    %v650 = vunpack.c.l.b16 %v155
    %v651 = vunpack.c.h.b16 %v155
    %v652 = vunpack.c.l.b16 %v156
    %v653 = vunpack.c.h.b16 %v156
    %v654 = vunpack.c.l.b16 %v157
    %v655 = vunpack.c.h.b16 %v157
    %v656 = vunpack.c.l.b16 %v158
    %v657 = vunpack.c.h.b16 %v158
    %v658 = vunpack.c.l.b16 %v159
    %v659 = vunpack.c.h.b16 %v159
    %v660 = vunpack.c.l.b16 %v160
    %v661 = vunpack.c.h.b16 %v160
    %v662 = vunpack.c.l.b16 %v161
    %v663 = vunpack.c.h.b16 %v161
    %v664 = vunpack.c.l.b16 %v162
    %v665 = vunpack.c.h.b16 %v162
    %v666 = vunpack.c.l.b16 %v163
    %v667 = vunpack.c.h.b16 %v163
    %v668 = vunpack.c.l.b16 %v164
    %v669 = vunpack.c.h.b16 %v164
    %v670 = vunpack.c.l.b16 %v165
    %v671 = vunpack.c.h.b16 %v165
    %v672 = vunpack.c.l.b16 %v166
    %v673 = vunpack.c.h.b16 %v166
    %v674 = vunpack.c.l.b16 %v167
    %v675 = vunpack.c.h.b16 %v167
    %v676 = vunpack.c.l.b16 %v168
    %v677 = vunpack.c.h.b16 %v168
    %v678 = vunpack.c.l.b16 %v169
    %v679 = vunpack.c.h.b16 %v169
    %v680 = vunpack.c.l.b16 %v170
    %v681 = vunpack.c.h.b16 %v170
    %v682 = vunpack.c.l.b16 %v171
    %v683 = vunpack.c.h.b16 %v171
    %v684 = vunpack.c.l.b16 %v172
    %v685 = vunpack.c.h.b16 %v172
    %v686 = vunpack.c.l.b16 %v173
    %v687 = vunpack.c.h.b16 %v173
    %v688 = vunpack.c.l.b16 %v174
    %v689 = vunpack.c.h.b16 %v174
    %v690 = vunpack.c.l.b16 %v175
    %v691 = vunpack.c.h.b16 %v175
    %v692 = vunpack.c.l.b16 %v176
    %v693 = vunpack.c.h.b16 %v176
    %v694 = vunpack.c.l.b16 %v177
    %v695 = vunpack.c.h.b16 %v177
    %v696 = vunpack.c.l.b16 %v178
    %v697 = vunpack.c.h.b16 %v178
    %v698 = vunpack.c.l.b16 %v179
    %v699 = vunpack.c.h.b16 %v179
    %v700 = vunpack.c.l.b16 %v180
    %v701 = vunpack.c.h.b16 %v180
    %v702 = vunpack.c.l.b16 %v181
    %v703 = vunpack.c.h.b16 %v181
    %v704 = vunpack.c.l.b16 %v182
    %v705 = vunpack.c.h.b16 %v182
    %v706 = vunpack.c.l.b16 %v183
    %v707 = vunpack.c.h.b16 %v183
    %v708 = vunpack.c.l.b16 %v184
    %v709 = vunpack.c.h.b16 %v184
    %v710 = vunpack.c.l.b16 %v185
    %v711 = vunpack.c.h.b16 %v185
    %v712 = vunpack.c.l.b16 %v186
    %v713 = vunpack.c.h.b16 %v186
    %v714 = vunpack.c.l.b16 %v187
    %v715 = vunpack.c.h.b16 %v187
    %v716 = vunpack.c.l.b16 %v188
    %v717 = vunpack.c.h.b16 %v188
    %v718 = vunpack.c.l.b16 %v189
    %v719 = vunpack.c.h.b16 %v189
    %v720 = vunpack.c.l.b16 %v190
    %v721 = vunpack.c.h.b16 %v190
    %v722 = vunpack.c.l.b16 %v191
    %v723 = vunpack.c.h.b16 %v191
    %v724 = vunpack.c.l.b16 %v192
    %v725 = vunpack.c.h.b16 %v192
    %v726 = vunpack.c.l.b16 %v193
    %v727 = vunpack.c.h.b16 %v193
    %v728 = vunpack.c.l.b16 %v194
    %v729 = vunpack.c.h.b16 %v194
    %v730 = vunpack.c.l.b16 %v195
    %v731 = vunpack.c.h.b16 %v195
    %v732 = vunpack.c.l.b16 %v196
    %v733 = vunpack.c.h.b16 %v196
    %v734 = vunpack.c.l.b16 %v197
    %v735 = vunpack.c.h.b16 %v197
    %v736 = vunpack.c.l.b16 %v198
    %v737 = vunpack.c.h.b16 %v198
    %v738 = vunpack.c.l.b16 %v199
    %v739 = vunpack.c.h.b16 %v199
    %v740 = vunpack.c.l.b16 %v200
    %v741 = vunpack.c.h.b16 %v200
    %v742 = vunpack.c.l.b16 %v201
    %v743 = vunpack.c.h.b16 %v201
    %v744 = vunpack.c.l.b16 %v202
    %v745 = vunpack.c.h.b16 %v202
    %v746 = vunpack.c.l.b16 %v203
    %v747 = vunpack.c.h.b16 %v203
    %v748 = vunpack.c.l.b16 %v204
    %v749 = vunpack.c.h.b16 %v204
    %v750 = vunpack.c.l.b16 %v205
    %v751 = vunpack.c.h.b16 %v205
    %v752 = vunpack.c.l.b16 %v206
    %v753 = vunpack.c.h.b16 %v206
    %v754 = vunpack.c.l.b16 %v207
    %v755 = vunpack.c.h.b16 %v207
    %v756 = vunpack.c.l.b16 %v208
    %v757 = vunpack.c.h.b16 %v208
    %v758 = vunpack.c.l.b16 %v209
    %v759 = vunpack.c.h.b16 %v209
    %v760 = vunpack.c.l.b16 %v210
    %v761 = vunpack.c.h.b16 %v210
    %v762 = vunpack.c.l.b16 %v211
    %v763 = vunpack.c.h.b16 %v211
    %v764 = vunpack.c.l.b16 %v212
    %v765 = vunpack.c.h.b16 %v212
    %v766 = vunpack.c.l.b16 %v213
    %v767 = vunpack.c.h.b16 %v213
    %v768 = vunpack.c.l.b16 %v214
    %v769 = vunpack.c.h.b16 %v214
    %v770 = vunpack.c.l.b16 %v215
    %v771 = vunpack.c.h.b16 %v215
    %v772 = vunpack.c.l.b16 %v216
    %v773 = vunpack.c.h.b16 %v216
    %v774 = vunpack.c.l.b16 %v217
    %v775 = vunpack.c.h.b16 %v217
    %v776 = vunpack.c.l.b16 %v218
    %v777 = vunpack.c.h.b16 %v218
    %v778 = vunpack.c.l.b16 %v219
    %v779 = vunpack.c.h.b16 %v219
    %v780 = vpack.c.b16 %v462, %v460
    %v781 = vpack.c.b16 %v463, %v461
    %v782 = vpack.c.b16 %v466, %v464
    %v783 = vpack.c.b16 %v467, %v465
    %v784 = vpack.c.b16 %v470, %v468
    %v785 = vpack.c.b16 %v471, %v469
    %v786 = vpack.c.b16 %v474, %v472
    %v787 = vpack.c.b16 %v475, %v473
    %v788 = vpack.c.b16 %v478, %v476
    %v789 = vpack.c.b16 %v479, %v477
    %v790 = vpack.c.b16 %v482, %v480
    %v791 = vpack.c.b16 %v483, %v481
    %v792 = vpack.c.b16 %v486, %v484
    %v793 = vpack.c.b16 %v487, %v485
    %v794 = vpack.c.b16 %v490, %v488
    %v795 = vpack.c.b16 %v491, %v489
    %v796 = vpack.c.b16 %v494, %v492
    %v797 = vpack.c.b16 %v495, %v493
    %v798 = vpack.c.b16 %v498, %v496
    %v799 = vpack.c.b16 %v499, %v497
    %v800 = vpack.c.b16 %v502, %v500
    %v801 = vpack.c.b16 %v503, %v501
    %v802 = vpack.c.b16 %v506, %v504
    %v803 = vpack.c.b16 %v507, %v505
    %v804 = vpack.c.b16 %v510, %v508
    %v805 = vpack.c.b16 %v511, %v509
    %v806 = vpack.c.b16 %v514, %v512
    %v807 = vpack.c.b16 %v515, %v513
    %v808 = vpack.c.b16 %v518, %v516
    %v809 = vpack.c.b16 %v519, %v517
    %v810 = vpack.c.b16 %v522, %v520
    %v811 = vpack.c.b16 %v523, %v521
    %v812 = vpack.c.b16 %v526, %v524
    %v813 = vpack.c.b16 %v527, %v525
    %v814 = vpack.c.b16 %v530, %v528
    %v815 = vpack.c.b16 %v531, %v529
    %v816 = vpack.c.b16 %v534, %v532
    %v817 = vpack.c.b16 %v535, %v533
    %v818 = vpack.c.b16 %v538, %v536
    %v819 = vpack.c.b16 %v539, %v537
    %v820 = vpack.c.b16 %v542, %v540
    %v821 = vpack.c.b16 %v543, %v541
    %v822 = vpack.c.b16 %v546, %v544
    %v823 = vpack.c.b16 %v547, %v545
    %v824 = vpack.c.b16 %v550, %v548
    %v825 = vpack.c.b16 %v551, %v549
    %v826 = vpack.c.b16 %v554, %v552
    %v827 = vpack.c.b16 %v555, %v553
    %v828 = vpack.c.b16 %v558, %v556
    %v829 = vpack.c.b16 %v559, %v557
    %v830 = vpack.c.b16 %v562, %v560
    %v831 = vpack.c.b16 %v563, %v561
    %v832 = vpack.c.b16 %v566, %v564
    %v833 = vpack.c.b16 %v567, %v565
    %v834 = vpack.c.b16 %v570, %v568
    %v835 = vpack.c.b16 %v571, %v569
    %v836 = vpack.c.b16 %v574, %v572
    %v837 = vpack.c.b16 %v575, %v573
    %v838 = vpack.c.b16 %v578, %v576
    %v839 = vpack.c.b16 %v579, %v577
    %v840 = vpack.c.b16 %v582, %v580
    %v841 = vpack.c.b16 %v583, %v581
    %v842 = vpack.c.b16 %v586, %v584
    %v843 = vpack.c.b16 %v587, %v585
    %v844 = vpack.c.b16 %v590, %v588
    %v845 = vpack.c.b16 %v591, %v589
    %v846 = vpack.c.b16 %v594, %v592
    %v847 = vpack.c.b16 %v595, %v593
    %v848 = vpack.c.b16 %v598, %v596
    %v849 = vpack.c.b16 %v599, %v597
    %v850 = vpack.c.b16 %v602, %v600
    %v851 = vpack.c.b16 %v603, %v601
    %v852 = vpack.c.b16 %v606, %v604
    %v853 = vpack.c.b16 %v607, %v605
    %v854 = vpack.c.b16 %v610, %v608
    %v855 = vpack.c.b16 %v611, %v609
    %v856 = vpack.c.b16 %v614, %v612
    %v857 = vpack.c.b16 %v615, %v613
    %v858 = vpack.c.b16 %v618, %v616
    %v859 = vpack.c.b16 %v619, %v617
    %v860 = vpack.c.b16 %v622, %v620
    %v861 = vpack.c.b16 %v623, %v621
    %v862 = vpack.c.b16 %v626, %v624
    %v863 = vpack.c.b16 %v627, %v625
    %v864 = vpack.c.b16 %v630, %v628
    %v865 = vpack.c.b16 %v631, %v629
    %v866 = vpack.c.b16 %v634, %v632
    %v867 = vpack.c.b16 %v635, %v633
    %v868 = vpack.c.b16 %v638, %v636
    %v869 = vpack.c.b16 %v639, %v637
    %v870 = vpack.c.b16 %v642, %v640
    %v871 = vpack.c.b16 %v643, %v641
    %v872 = vpack.c.b16 %v646, %v644
    %v873 = vpack.c.b16 %v647, %v645
    %v874 = vpack.c.b16 %v650, %v648
    %v875 = vpack.c.b16 %v651, %v649
    %v876 = vpack.c.b16 %v654, %v652
    %v877 = vpack.c.b16 %v655, %v653
    %v878 = vpack.c.b16 %v658, %v656
    %v879 = vpack.c.b16 %v659, %v657
    %v880 = vpack.c.b16 %v662, %v660
    %v881 = vpack.c.b16 %v663, %v661
    %v882 = vpack.c.b16 %v666, %v664
    %v883 = vpack.c.b16 %v667, %v665
    %v884 = vpack.c.b16 %v670, %v668
    %v885 = vpack.c.b16 %v671, %v669
    %v886 = vpack.c.b16 %v674, %v672
    %v887 = vpack.c.b16 %v675, %v673
    %v888 = vpack.c.b16 %v678, %v676
    %v889 = vpack.c.b16 %v679, %v677
    %v890 = vpack.c.b16 %v682, %v680
    %v891 = vpack.c.b16 %v683, %v681
    %v892 = vpack.c.b16 %v686, %v684
    %v893 = vpack.c.b16 %v687, %v685
    %v894 = vpack.c.b16 %v690, %v688
    %v895 = vpack.c.b16 %v691, %v689
    %v896 = vpack.c.b16 %v694, %v692
    %v897 = vpack.c.b16 %v695, %v693
    %v898 = vpack.c.b16 %v698, %v696
    %v899 = vpack.c.b16 %v699, %v697
    %v900 = vpack.c.b16 %v702, %v700
    %v901 = vpack.c.b16 %v703, %v701
    %v902 = vpack.c.b16 %v706, %v704
    %v903 = vpack.c.b16 %v707, %v705
    %v904 = vpack.c.b16 %v710, %v708
    %v905 = vpack.c.b16 %v711, %v709
    %v906 = vpack.c.b16 %v714, %v712
    %v907 = vpack.c.b16 %v715, %v713
    %v908 = vpack.c.b16 %v718, %v716
    %v909 = vpack.c.b16 %v719, %v717
    %v910 = vpack.c.b16 %v722, %v720
    %v911 = vpack.c.b16 %v723, %v721
    %v912 = vpack.c.b16 %v726, %v724
    %v913 = vpack.c.b16 %v727, %v725
    %v914 = vpack.c.b16 %v730, %v728
    %v915 = vpack.c.b16 %v731, %v729
    %v916 = vpack.c.b16 %v734, %v732
    %v917 = vpack.c.b16 %v735, %v733
    %v918 = vpack.c.b16 %v738, %v736
    %v919 = vpack.c.b16 %v739, %v737
    %v920 = vpack.c.b16 %v742, %v740
    %v921 = vpack.c.b16 %v743, %v741
    %v922 = vpack.c.b16 %v746, %v744
    %v923 = vpack.c.b16 %v747, %v745
    %v924 = vpack.c.b16 %v750, %v748
    %v925 = vpack.c.b16 %v751, %v749
    %v926 = vpack.c.b16 %v754, %v752
    %v927 = vpack.c.b16 %v755, %v753
    %v928 = vpack.c.b16 %v758, %v756
    %v929 = vpack.c.b16 %v759, %v757
    %v930 = vpack.c.b16 %v762, %v760
    %v931 = vpack.c.b16 %v763, %v761
    %v932 = vpack.c.b16 %v766, %v764
    %v933 = vpack.c.b16 %v767, %v765
    %v934 = vpack.c.b16 %v770, %v768
    %v935 = vpack.c.b16 %v771, %v769
    %v936 = vpack.c.b16 %v774, %v772
    %v937 = vpack.c.b16 %v775, %v773
    %v938 = vpack.c.b16 %v778, %v776
    %v939 = vpack.c.b16 %v779, %v777
    %1100 = vmatprep.subr.bf16.mxu0 %v781
    %1101 = vmatpush1.bf16.msra.mxu0 %v780
    %1102 = vmatprep.subr.bf16.mxu0 %v783
    %1103 = vmatpush1.bf16.msra.mxu0 %v782
    %1104 = vmatprep.subr.bf16.mxu0 %v785
    %1105 = vmatpush1.bf16.msra.mxu0 %v784
    %1106 = vmatprep.subr.bf16.mxu0 %v787
    %1107 = vmatpush1.bf16.msra.mxu0 %v786
    %1108 = vmatprep.subr.bf16.mxu0 %v789
    %1109 = vmatpush1.bf16.msra.mxu0 %v788
    %1110 = vmatprep.subr.bf16.mxu0 %v791
    %1111 = vmatpush1.bf16.msra.mxu0 %v790
    %1112 = vmatprep.subr.bf16.mxu0 %v793
    %1113 = vmatpush1.bf16.msra.mxu0 %v792
    %1114 = vmatprep.subr.bf16.mxu0 %v795
    %1115 = vmatpush1.bf16.msra.mxu0 %v794
    %1116 = vmatprep.subr.bf16.mxu0 %v797
    %1117 = vmatpush1.bf16.msra.mxu0 %v796
    %1118 = vmatprep.subr.bf16.mxu0 %v799
    %1119 = vmatpush1.bf16.msra.mxu0 %v798
    %1120 = vmatprep.subr.bf16.mxu0 %v801
    %1121 = vmatpush1.bf16.msra.mxu0 %v800
    %1122 = vmatprep.subr.bf16.mxu0 %v803
    %1123 = vmatpush1.bf16.msra.mxu0 %v802
    %1124 = vmatprep.subr.bf16.mxu0 %v805
    %1125 = vmatpush1.bf16.msra.mxu0 %v804
    %1126 = vmatprep.subr.bf16.mxu0 %v807
    %1127 = vmatpush1.bf16.msra.mxu0 %v806
    %1128 = vmatprep.subr.bf16.mxu0 %v809
    %1129 = vmatpush1.bf16.msra.mxu0 %v808
    %1130 = vmatprep.subr.bf16.mxu0 %v811
    %1131 = vmatpush1.bf16.msra.mxu0 %v810
    %1132 = vmatprep.mubr.bf16.mxu0 %v51
    %1133 = vmatmul.mubr.bf16.gmra.mrb[0].mxu0 %v50
    %v1134 = vpop.f32.mrb[0].mxu0
    %v1135 = vadd.f32 %v298, %v1134
    %v1136 = vpop.f32.mrb[0].mxu0
    %v1137 = vadd.f32 %v299, %v1136
    %v1138 = vpop.f32.mrb[0].mxu0
    %v1139 = vpop.f32.mrb[0].mxu0
    %1140 = vdwg.mxu0
    %1141 = vmatprep.subr.bf16.mxu0 %v813
    %1142 = vmatpush1.bf16.msra.mxu0 %v812
    %1143 = vmatprep.subr.bf16.mxu0 %v815
    %1144 = vmatpush1.bf16.msra.mxu0 %v814
    %1145 = vmatprep.subr.bf16.mxu0 %v817
    %1146 = vmatpush1.bf16.msra.mxu0 %v816
    %1147 = vmatprep.subr.bf16.mxu0 %v819
    %1148 = vmatpush1.bf16.msra.mxu0 %v818
    %1149 = vmatprep.subr.bf16.mxu0 %v821
    %1150 = vmatpush1.bf16.msra.mxu0 %v820
    %1151 = vmatprep.subr.bf16.mxu0 %v823
    %1152 = vmatpush1.bf16.msra.mxu0 %v822
    %1153 = vmatprep.subr.bf16.mxu0 %v825
    %1154 = vmatpush1.bf16.msra.mxu0 %v824
    %1155 = vmatprep.subr.bf16.mxu0 %v827
    %1156 = vmatpush1.bf16.msra.mxu0 %v826
    %1157 = vmatprep.subr.bf16.mxu0 %v829
    %1158 = vmatpush1.bf16.msra.mxu0 %v828
    %1159 = vmatprep.subr.bf16.mxu0 %v831
    %1160 = vmatpush1.bf16.msra.mxu0 %v830
    %1161 = vmatprep.subr.bf16.mxu0 %v833
    %1162 = vmatpush1.bf16.msra.mxu0 %v832
    %1163 = vmatprep.subr.bf16.mxu0 %v835
    %1164 = vmatpush1.bf16.msra.mxu0 %v834
    %1165 = vmatprep.subr.bf16.mxu0 %v837
    %1166 = vmatpush1.bf16.msra.mxu0 %v836
    %1167 = vmatprep.subr.bf16.mxu0 %v839
    %1168 = vmatpush1.bf16.msra.mxu0 %v838
    %1169 = vmatprep.subr.bf16.mxu0 %v841
    %1170 = vmatpush1.bf16.msra.mxu0 %v840
    %1171 = vmatprep.subr.bf16.mxu0 %v843
    %1172 = vmatpush1.bf16.msra.mxu0 %v842
    %1173 = vmatprep.mubr.bf16.mxu0 %v53
    %1174 = vmatmul.mubr.bf16.gmra.mrb[0].mxu0 %v52
    %v1175 = vpop.f32.mrb[0].mxu0
    %v1176 = vadd.f32 %v1135, %v1175
    %v1177 = vpop.f32.mrb[0].mxu0
    %v1178 = vadd.f32 %v1137, %v1177
    %v1179 = vpop.f32.mrb[0].mxu0
    %v1180 = vpop.f32.mrb[0].mxu0
    %1181 = vdwg.mxu0
    %1182 = vmatprep.subr.bf16.mxu0 %v845
    %1183 = vmatpush1.bf16.msra.mxu0 %v844
    %1184 = vmatprep.subr.bf16.mxu0 %v847
    %1185 = vmatpush1.bf16.msra.mxu0 %v846
    %1186 = vmatprep.subr.bf16.mxu0 %v849
    %1187 = vmatpush1.bf16.msra.mxu0 %v848
    %1188 = vmatprep.subr.bf16.mxu0 %v851
    %1189 = vmatpush1.bf16.msra.mxu0 %v850
    %1190 = vmatprep.subr.bf16.mxu0 %v853
    %1191 = vmatpush1.bf16.msra.mxu0 %v852
    %1192 = vmatprep.subr.bf16.mxu0 %v855
    %1193 = vmatpush1.bf16.msra.mxu0 %v854
    %1194 = vmatprep.subr.bf16.mxu0 %v857
    %1195 = vmatpush1.bf16.msra.mxu0 %v856
    %1196 = vmatprep.subr.bf16.mxu0 %v859
    %1197 = vmatpush1.bf16.msra.mxu0 %v858
    %1198 = vmatprep.subr.bf16.mxu0 %v861
    %1199 = vmatpush1.bf16.msra.mxu0 %v860
    %1200 = vmatprep.subr.bf16.mxu0 %v863
    %1201 = vmatpush1.bf16.msra.mxu0 %v862
    %1202 = vmatprep.subr.bf16.mxu0 %v865
    %1203 = vmatpush1.bf16.msra.mxu0 %v864
    %1204 = vmatprep.subr.bf16.mxu0 %v867
    %1205 = vmatpush1.bf16.msra.mxu0 %v866
    %1206 = vmatprep.subr.bf16.mxu0 %v869
    %1207 = vmatpush1.bf16.msra.mxu0 %v868
    %1208 = vmatprep.subr.bf16.mxu0 %v871
    %1209 = vmatpush1.bf16.msra.mxu0 %v870
    %1210 = vmatprep.subr.bf16.mxu0 %v873
    %1211 = vmatpush1.bf16.msra.mxu0 %v872
    %1212 = vmatprep.subr.bf16.mxu0 %v875
    %1213 = vmatpush1.bf16.msra.mxu0 %v874
    %1214 = vmatprep.mubr.bf16.mxu0 %v55
    %1215 = vmatmul.mubr.bf16.gmra.mrb[0].mxu0 %v54
    %v1216 = vpop.f32.mrb[0].mxu0
    %v1217 = vadd.f32 %v1176, %v1216
    %v1218 = vpop.f32.mrb[0].mxu0
    %v1219 = vadd.f32 %v1178, %v1218
    %v1220 = vpop.f32.mrb[0].mxu0
    %v1221 = vpop.f32.mrb[0].mxu0
    %1222 = vdwg.mxu0
    %1223 = vmatprep.subr.bf16.mxu0 %v877
    %1224 = vmatpush1.bf16.msra.mxu0 %v876
    %1225 = vmatprep.subr.bf16.mxu0 %v879
    %1226 = vmatpush1.bf16.msra.mxu0 %v878
    %1227 = vmatprep.subr.bf16.mxu0 %v881
    %1228 = vmatpush1.bf16.msra.mxu0 %v880
    %1229 = vmatprep.subr.bf16.mxu0 %v883
    %1230 = vmatpush1.bf16.msra.mxu0 %v882
    %1231 = vmatprep.subr.bf16.mxu0 %v885
    %1232 = vmatpush1.bf16.msra.mxu0 %v884
    %1233 = vmatprep.subr.bf16.mxu0 %v887
    %1234 = vmatpush1.bf16.msra.mxu0 %v886
    %1235 = vmatprep.subr.bf16.mxu0 %v889
    %1236 = vmatpush1.bf16.msra.mxu0 %v888
    %1237 = vmatprep.subr.bf16.mxu0 %v891
    %1238 = vmatpush1.bf16.msra.mxu0 %v890
    %1239 = vmatprep.subr.bf16.mxu0 %v893
    %1240 = vmatpush1.bf16.msra.mxu0 %v892
    %1241 = vmatprep.subr.bf16.mxu0 %v895
    %1242 = vmatpush1.bf16.msra.mxu0 %v894
    %1243 = vmatprep.subr.bf16.mxu0 %v897
    %1244 = vmatpush1.bf16.msra.mxu0 %v896
    %1245 = vmatprep.subr.bf16.mxu0 %v899
    %1246 = vmatpush1.bf16.msra.mxu0 %v898
    %1247 = vmatprep.subr.bf16.mxu0 %v901
    %1248 = vmatpush1.bf16.msra.mxu0 %v900
    %1249 = vmatprep.subr.bf16.mxu0 %v903
    %1250 = vmatpush1.bf16.msra.mxu0 %v902
    %1251 = vmatprep.subr.bf16.mxu0 %v905
    %1252 = vmatpush1.bf16.msra.mxu0 %v904
    %1253 = vmatprep.subr.bf16.mxu0 %v907
    %1254 = vmatpush1.bf16.msra.mxu0 %v906
    %1255 = vmatprep.mubr.bf16.mxu0 %v57
    %1256 = vmatmul.mubr.bf16.gmra.mrb[0].mxu0 %v56
    %v1257 = vpop.f32.mrb[0].mxu0
    %v1258 = vadd.f32 %v1217, %v1257
    %v1259 = vpop.f32.mrb[0].mxu0
    %v1260 = vadd.f32 %v1219, %v1259
    %v1261 = vpop.f32.mrb[0].mxu0
    %v1262 = vpop.f32.mrb[0].mxu0
    %1263 = vdwg.mxu0
    %1264 = vmatprep.subr.bf16.mxu0 %v909
    %1265 = vmatpush1.bf16.msra.mxu0 %v908
    %1266 = vmatprep.subr.bf16.mxu0 %v911
    %1267 = vmatpush1.bf16.msra.mxu0 %v910
    %1268 = vmatprep.subr.bf16.mxu0 %v913
    %1269 = vmatpush1.bf16.msra.mxu0 %v912
    %1270 = vmatprep.subr.bf16.mxu0 %v915
    %1271 = vmatpush1.bf16.msra.mxu0 %v914
    %1272 = vmatprep.subr.bf16.mxu0 %v917
    %1273 = vmatpush1.bf16.msra.mxu0 %v916
    %1274 = vmatprep.subr.bf16.mxu0 %v919
    %1275 = vmatpush1.bf16.msra.mxu0 %v918
    %1276 = vmatprep.subr.bf16.mxu0 %v921
    %1277 = vmatpush1.bf16.msra.mxu0 %v920
    %1278 = vmatprep.subr.bf16.mxu0 %v923
    %1279 = vmatpush1.bf16.msra.mxu0 %v922
    %1280 = vmatprep.subr.bf16.mxu0 %v925
    %1281 = vmatpush1.bf16.msra.mxu0 %v924
    %1282 = vmatprep.subr.bf16.mxu0 %v927
    %1283 = vmatpush1.bf16.msra.mxu0 %v926
    %1284 = vmatprep.subr.bf16.mxu0 %v929
    %1285 = vmatpush1.bf16.msra.mxu0 %v928
    %1286 = vmatprep.subr.bf16.mxu0 %v931
    %1287 = vmatpush1.bf16.msra.mxu0 %v930
    %1288 = vmatprep.subr.bf16.mxu0 %v933
    %1289 = vmatpush1.bf16.msra.mxu0 %v932
    %1290 = vmatprep.subr.bf16.mxu0 %v935
    %1291 = vmatpush1.bf16.msra.mxu0 %v934
    %1292 = vmatprep.subr.bf16.mxu0 %v937
    %1293 = vmatpush1.bf16.msra.mxu0 %v936
    %1294 = vmatprep.subr.bf16.mxu0 %v939
    %1295 = vmatpush1.bf16.msra.mxu0 %v938
    %1296 = vmatprep.mubr.bf16.mxu0 %v59
    %1297 = vmatmul.mubr.bf16.gmra.mrb[0].mxu0 %v58
    %v1298 = vpop.f32.mrb[0].mxu0
    %v1299 = vadd.f32 %v1258, %v1298
    %v1300 = vpop.f32.mrb[0].mxu0
    %v1301 = vadd.f32 %v1260, %v1300
    %v1302 = vpop.f32.mrb[0].mxu0
    %v1303 = vpop.f32.mrb[0].mxu0
    %1304 = vdwg.mxu0
    %v1305 = vld [vmem:[%s4] sm:$0x3]
    %v1307 = vlaneseq
    %v1308 = vshrl.u32 %v1307, 7
    %v1309 = vsub.s32 0, %v1308
    %v1310 = vrot.slane %v1305, %v1309
    %v1311 = vlaneseq
    %v1312 = vshrl.u32 %v1311, 7
    %v1313 = vsub.s32 1, %v1312
    %v1314 = vrot.slane %v1305, %v1313
    %v1317 = vadd.f32 %v1299, %v1310
    %v1318 = vadd.f32 %v1301, %v1314
    %v1319 = vmax.f32 %v1317, 0.0
    %v1320 = vmax.f32 %v1318, 0.0
    %v1321 = vld [vmem:[%s5] sm:$0xff]
    %v1322 = vld [vmem:[%s5 + $0x8] sm:$0xff]
    %v1323 = vld [vmem:[%s5 + $0x10] sm:$0xff]
    %v1324 = vld [vmem:[%s5 + $0x18] sm:$0xff]
    %v1325 = vld [vmem:[%s5 + $0x20] sm:$0xff]
    %v1326 = vld [vmem:[%s5 + $0x28] sm:$0xff]
    %v1327 = vld [vmem:[%s5 + $0x30] sm:$0xff]
    %v1328 = vld [vmem:[%s5 + $0x38] sm:$0xff]
    %v1329 = vld [vmem:[%s5 + $0x40] sm:$0xff]
    %v1330 = vld [vmem:[%s5 + $0x48] sm:$0xff]
    %v1331 = vld [vmem:[%s5 + $0x50] sm:$0xff]
    %v1332 = vld [vmem:[%s5 + $0x58] sm:$0xff]
    %v1333 = vld [vmem:[%s5 + $0x60] sm:$0xff]
    %v1334 = vld [vmem:[%s5 + $0x68] sm:$0xff]
    %v1335 = vld [vmem:[%s5 + $0x70] sm:$0xff]
    %v1336 = vld [vmem:[%s5 + $0x78] sm:$0xff]
    %v1337 = vld [vmem:[%s5 + $0x80] sm:$0xff]
    %v1338 = vld [vmem:[%s5 + $0x88] sm:$0xff]
    %v1339 = vld [vmem:[%s5 + $0x90] sm:$0xff]
    %v1340 = vld [vmem:[%s5 + $0x98] sm:$0xff]
    %v1341 = vld [vmem:[%s5 + $0xa0] sm:$0xff]
    %v1342 = vld [vmem:[%s5 + $0xa8] sm:$0xff]
    %v1343 = vld [vmem:[%s5 + $0xb0] sm:$0xff]
    %v1344 = vld [vmem:[%s5 + $0xb8] sm:$0xff]
    %v1345 = vld [vmem:[%s5 + $0xc0] sm:$0xff]
    %v1346 = vld [vmem:[%s5 + $0xc8] sm:$0xff]
    %v1347 = vld [vmem:[%s5 + $0xd0] sm:$0xff]
    %v1348 = vld [vmem:[%s5 + $0xd8] sm:$0xff]
    %v1349 = vld [vmem:[%s5 + $0xe0] sm:$0xff]
    %v1350 = vld [vmem:[%s5 + $0xe8] sm:$0xff]
    %v1351 = vld [vmem:[%s5 + $0xf0] sm:$0xff]
    %v1352 = vld [vmem:[%s5 + $0xf8] sm:$0xff]
    %v1353 = vld [vmem:[%s6] sm:$0x1]
    %v1355 = vlaneseq
    %v1356 = vshrl.u32 %v1355, 7
    %v1357 = vsub.s32 0, %v1356
    %v1358 = vrot.slane %v1353, %v1357
    %1360 = vmatprep.subr.mxu0 0.0
    %1361 = vmatpush1.msra.mxu0 %v1321
    %1362 = vmatprep.subr.mxu0 0.0
    %1363 = vmatpush1.msra.mxu0 %v1322
    %1364 = vmatprep.subr.mxu0 0.0
    %1365 = vmatpush1.msra.mxu0 %v1323
    %1366 = vmatprep.subr.mxu0 0.0
    %1367 = vmatpush1.msra.mxu0 %v1324
    %1368 = vmatprep.subr.mxu0 0.0
    %1369 = vmatpush1.msra.mxu0 %v1325
    %1370 = vmatprep.subr.mxu0 0.0
    %1371 = vmatpush1.msra.mxu0 %v1326
    %1372 = vmatprep.subr.mxu0 0.0
    %1373 = vmatpush1.msra.mxu0 %v1327
    %1374 = vmatprep.subr.mxu0 0.0
    %1375 = vmatpush1.msra.mxu0 %v1328
    %1376 = vmatprep.subr.mxu0 0.0
    %1377 = vmatpush1.msra.mxu0 %v1329
    %1378 = vmatprep.subr.mxu0 0.0
    %1379 = vmatpush1.msra.mxu0 %v1330
    %1380 = vmatprep.subr.mxu0 0.0
    %1381 = vmatpush1.msra.mxu0 %v1331
    %1382 = vmatprep.subr.mxu0 0.0
    %1383 = vmatpush1.msra.mxu0 %v1332
    %1384 = vmatprep.subr.mxu0 0.0
    %1385 = vmatpush1.msra.mxu0 %v1333
    %1386 = vmatprep.subr.mxu0 0.0
    %1387 = vmatpush1.msra.mxu0 %v1334
    %1388 = vmatprep.subr.mxu0 0.0
    %1389 = vmatpush1.msra.mxu0 %v1335
    %1390 = vmatprep.subr.mxu0 0.0
    %1391 = vmatpush1.msra.mxu0 %v1336
    %1392 = vmatprep.subr.mxu0 0.0
    %1393 = vmatpush1.msra.mxu0 %v1337
    %1394 = vmatprep.subr.mxu0 0.0
    %1395 = vmatpush1.msra.mxu0 %v1338
    %1396 = vmatprep.subr.mxu0 0.0
    %1397 = vmatpush1.msra.mxu0 %v1339
    %1398 = vmatprep.subr.mxu0 0.0
    %1399 = vmatpush1.msra.mxu0 %v1340
    %1400 = vmatprep.subr.mxu0 0.0
    %1401 = vmatpush1.msra.mxu0 %v1341
    %1402 = vmatprep.subr.mxu0 0.0
    %1403 = vmatpush1.msra.mxu0 %v1342
    %1404 = vmatprep.subr.mxu0 0.0
    %1405 = vmatpush1.msra.mxu0 %v1343
    %1406 = vmatprep.subr.mxu0 0.0
    %1407 = vmatpush1.msra.mxu0 %v1344
    %1408 = vmatprep.subr.mxu0 0.0
    %1409 = vmatpush1.msra.mxu0 %v1345
    %1410 = vmatprep.subr.mxu0 0.0
    %1411 = vmatpush1.msra.mxu0 %v1346
    %1412 = vmatprep.subr.mxu0 0.0
    %1413 = vmatpush1.msra.mxu0 %v1347
    %1414 = vmatprep.subr.mxu0 0.0
    %1415 = vmatpush1.msra.mxu0 %v1348
    %1416 = vmatprep.subr.mxu0 0.0
    %1417 = vmatpush1.msra.mxu0 %v1349
    %1418 = vmatprep.subr.mxu0 0.0
    %1419 = vmatpush1.msra.mxu0 %v1350
    %1420 = vmatprep.subr.mxu0 0.0
    %1421 = vmatpush1.msra.mxu0 %v1351
    %1422 = vmatprep.subr.mxu0 0.0
    %1423 = vmatpush1.msra.mxu0 %v1352
    %1424 = vmatprep.mubr.f32.mxu0 %v1320
    %1425 = vmatmul.mubr.f32.gmra.mrb[0].mxu0 %v1319
    %v1426 = vpop.f32.mrb[0].mxu0
    %v1427 = vadd.f32 %v1358, %v1426
    %v1428 = vpop.f32.mrb[0].mxu0
    %1429 = vdwg.mxu0
    %vm1430 = vcmask 64512
    %1431 = vst.msk [vmem:[%s7] sm:$0xff] %vm1430, %v1427
    // Predicated region
    $region34: #{linear_sensor_forward.1} parent=1 // pred_check
      _
    $region35: #{linear_sensor_forward.1} parent=1 // pred_check_branch
      %1433 = sbr.rel (0) target = $region37
    $region36: #{linear_sensor_forward.1} parent=1 // pred_region
      _
    $region37: #{linear_sensor_forward.1} parent=1 // pred_fallthru
      _
    // Predicated region
    $region38: #{linear_sensor_forward.1} parent=1 // pred_check
      _
    $region39: #{linear_sensor_forward.1} parent=1 // pred_check_branch
      %1435 = sbr.rel (0) target = $region41
    $region40: #{linear_sensor_forward.1} parent=1 // pred_region
      _
    $region41: #{linear_sensor_forward.1} parent=1 // pred_fallthru
      _
    %1436 = vsyncpa [#allocation3], 1

</llo_original>
